<compile_context>
chip_gen: v7x
topology: tpu7x:2x2x1
jax: 0.10.0
libtpu: 0.0.40
codegen_flags: <defaults>
</compile_context>

<pallas_src>
import jax
import jax.numpy as jnp
from jax.experimental import pallas as pl
from jax.experimental.pallas import tpu as pltpu


TARGET_BLOCK_BYTES = 8 * 1024 * 1024   # ~8 MiB input block (x2 for out, x2 buffered = 32 MiB)
VMEM_LIMIT_BYTES = 48 * 1024 * 1024    # fits v5e/v6e (128 MiB) and v7x (64 MiB physical)


def _scale_kernel(scale_ref, x_ref, o_ref):
    # scale is an SMEM runtime operand -> no recompile when its value changes;
    # the VPU multiply hides under the DMA-bound pipeline.
    s = scale_ref[0]
    o_ref[...] = (x_ref[...].astype(jnp.float32) * s).astype(o_ref.dtype)


def _run_slab(x2d: jax.Array, scale_arr: jax.Array) -> jax.Array:
    """Elementwise scale of a (rows, width) slab (width % 128 == 0, or block == full dim)."""
    rows, width = x2d.shape
    dtype = x2d.dtype
    itemsize = jnp.dtype(dtype).itemsize
    n = rows * width

    # dtype-aware minimum sublane tile (f32:8, bf16:16, int8/fp8:32).
    sublane_min = {4: 8, 2: 16, 1: 32}.get(itemsize, 8)

    # Lane-axis tiling only needed for extremely wide rows.
    target_elems = TARGET_BLOCK_BYTES // itemsize
    if width > target_elems and width % 128 == 0:
        tile_width = max(128, (target_elems // 128) * 128)
    else:
        tile_width = width

    target_rows = max(sublane_min, target_elems // tile_width)
    if rows <= target_rows:
        if rows >= 2 * sublane_min:
            # Guarantee grid >= 2 so v7x megacore shards across both TensorCores.
            half = (rows + 1) // 2
            tile_rows = max(sublane_min, (half // sublane_min) * sublane_min)
        else:
            tile_rows = rows  # full-dim block: always a legal block shape
    else:
        tile_rows = max(sublane_min, (target_rows // sublane_min) * sublane_min)

    grid = (pl.cdiv(rows, tile_rows), pl.cdiv(width, tile_width))
    cost = pl.CostEstimate(flops=n, transcendentals=0,
                           bytes_accessed=2 * n * itemsize)

    return pl.pallas_call(
        _scale_kernel,
        out_shape=jax.ShapeDtypeStruct((rows, width), dtype),
        grid=grid,
        in_specs=[
            pl.BlockSpec(memory_space=pltpu.MemorySpace.SMEM),      # scale scalar
            pl.BlockSpec((tile_rows, tile_width), lambda i, j: (i, j)),
        ],
        out_specs=pl.BlockSpec((tile_rows, tile_width), lambda i, j: (i, j)),
        compiler_params=pltpu.CompilerParams(
            dimension_semantics=("parallel", "parallel"),
            vmem_limit_bytes=VMEM_LIMIT_BYTES,
        ),
        cost_estimate=cost,
    )(scale_arr, x2d)


def scale_forward(x: jax.Array, scale) -> jax.Array:
    """Elementwise x * scale computed in a Pallas TPU kernel."""
    orig_shape = x.shape
    dtype = x.dtype
    n = int(x.size)

    if n == 0:
        return x

    # TODO(synk): integer input dtypes would need float type-promotion to match
    # PyTorch's `int_tensor * python_float`; only float dtypes handled here.
    scale_arr = jnp.asarray([scale], dtype=jnp.float32)

    # 1) Layout-preserving fast path (common NN case): trailing dim already
    #    lane-aligned -> collapse leading dims only; no relayout copies.
    if x.ndim >= 2 and orig_shape[-1] % 128 == 0:
        out2d = _run_slab(jnp.reshape(x, (-1, orig_shape[-1])), scale_arr)
        return jnp.reshape(out2d, orig_shape)

    x_flat = jnp.reshape(x, (-1,))

    # 2) Flat slab: widest lane-aligned width that divides n exactly.
    if n % 128 == 0:
        width = 128
        for cand in (8192, 4096, 2048, 1024, 512, 256):
            if n % cand == 0:
                width = cand
                break
        out2d = _run_slab(jnp.reshape(x_flat, (n // width, width)), scale_arr)
        return jnp.reshape(out2d, orig_shape)

    # 3) n not a multiple of 128: tiled kernel on the 128-aligned bulk, plain
    #    jnp for the tiny (<128-element) tail -> full pipelining, no VMEM OOM.
    n_bulk = (n // 128) * 128
    parts = []
    if n_bulk > 0:
        width = 128
        for cand in (8192, 4096, 2048, 1024, 512, 256):
            if n_bulk % cand == 0:
                width = cand
                break
        bulk2d = jnp.reshape(x_flat[:n_bulk], (n_bulk // width, width))
        parts.append(jnp.reshape(_run_slab(bulk2d, scale_arr), (-1,)))
    tail = x_flat[n_bulk:]
    parts.append((tail.astype(jnp.float32) * scale_arr[0]).astype(dtype))
    out_flat = jnp.concatenate(parts) if len(parts) > 1 else parts[0]
    return jnp.reshape(out_flat, orig_shape)


if __name__ == "__main__":
    key = jax.random.PRNGKey(0)
    scale = 0.5  # deterministic module "parameter" (Scale(scale=0.5))

    k1, k2, k3 = jax.random.split(key, 3)
    tests = [
        jax.random.normal(k1, (2, 4, 16, 16), dtype=jnp.float32),  # flat-slab path
        jax.random.normal(k2, (2, 8, 128), dtype=jnp.float32),     # layout-preserving path
        jax.random.normal(k3, (5, 27), dtype=jnp.float32),         # non-128-aligned bulk+tail path
    ]

    for x in tests:
        out = jax.block_until_ready(scale_forward(x, scale))
        ref = x * scale
        assert out.shape == x.shape and out.dtype == x.dtype
        assert jnp.allclose(out, ref, atol=1e-6, rtol=1e-6), f"mismatch for shape {x.shape}"

    print("KERNEL_OK")
</pallas_src>

<mosaic_0001>
module attributes {stable_mosaic.version = 11 : i64} {
  func.func @_scale_kernel(%arg0: i32, %arg1: i32, %arg2: memref<1xf32, #tpu.memory_space<smem>>, %arg3: memref<1x2048xf32, #tpu.memory_space<vmem>>, %arg4: memref<1x2048xf32, #tpu.memory_space<vmem>>) attributes {dimension_semantics = [#tpu.dimension_semantics<parallel>, #tpu.dimension_semantics<parallel>], iteration_bounds = array<i64: 1, 1>, scalar_prefetch = 0 : i64, scratch_operands = 0 : i64, tpu.core_type = #tpu.core_type<tc>, window_params = [{transform_indices = @transform_0, window_bounds = array<i64: 1>}, {transform_indices = @transform_1, window_bounds = array<i64: 1, 2048>}, {transform_indices = @transform_2, window_bounds = array<i64: 1, 2048>}]} {
    %c0 = arith.constant 0 : index
    %0 = memref.load %arg2[%c0] : memref<1xf32, #tpu.memory_space<smem>>
    %c0_0 = arith.constant 0 : index
    %c0_1 = arith.constant 0 : index
    %1 = vector.load %arg3[%c0_0, %c0_1] : memref<1x2048xf32, #tpu.memory_space<vmem>>, vector<1x2048xf32>
    %2 = vector.broadcast %0 : f32 to vector<1x2048xf32>
    %3 = arith.mulf %1, %2 : vector<1x2048xf32>
    %c0_2 = arith.constant 0 : index
    %c0_3 = arith.constant 0 : index
    %4 = vector.load %arg4[%c0_2, %c0_3] : memref<1x2048xf32, #tpu.memory_space<vmem>>, vector<1x2048xf32>
    tpu.vector_store %arg4[%c0_2, %c0_3], %3 {strides = array<i32>} : memref<1x2048xf32, #tpu.memory_space<vmem>>, vector<1x2048xf32>,
    return
  }
  func.func @transform_0(%arg0: i32, %arg1: i32) -> i32 {
    %c0_i32 = arith.constant 0 : i32
    %c0_i32_0 = arith.constant 0 : i32
    return %c0_i32 : i32
  }
  func.func @transform_1(%arg0: i32, %arg1: i32) -> (i32, i32) {
    %c0_i32 = arith.constant 0 : i32
    return %arg0, %arg1 : i32, i32
  }
  func.func @transform_2(%arg0: i32, %arg1: i32) -> (i32, i32) {
    %c0_i32 = arith.constant 0 : i32
    return %arg0, %arg1 : i32, i32
  }
}

</mosaic_0001>

<llo_original>
// kernel: tpu_custom_call.1
$region0: #{tpu_custom_call.1}
  #allocation0 [shape = 'u32[]', space=smem, size = 0x4, offset = 0x4, fixed_abs, tag = 'smem constant byte address 0x4 - core index']
  #allocation1 [shape = 'u32[144,128]{1,0:T(1,128)}', space=vmem, size = 0x12000, scoped, tag = 'internal scratch']
  #allocation2 [shape = 'f32[1]{0:T(128)S(6)}', space=smem, size = 0x200, scoped, tag = 'scoped memory for tpu_custom_call.1']
  %s0 = inlined_call_operand.<no memory space> [shape: f32[1], index: 0, kind: input, shape index: {}]
  %s1 = inlined_call_operand.hbm [shape: f32[1,2048], index: 1, kind: input, shape index: {}]
  %s2 = inlined_call_operand.hbm [shape: f32[1,2048], index: 2, kind: output, shape index: {}]
  %s3 = sld [smem:[#allocation0]]
  $region22: #{tpu_custom_call.1} parent=0
    _
  %s5 = ssub.s32 1, %s3
  %s6 = scalar_select 0, %s5, %s3
  %7 = sst [smem:[#allocation2]] %s0
  $region1: #{tpu_custom_call.1} parent=0
    #allocation3 [shape = 'u8[8192]{0}', space=vmem, size = 0x2000, scoped, tag = 'input window, operand 1, single buffered']
    #allocation4 [shape = 's32[1]{0}', space=sflag, size = 0x4, scoped, tag = 'scoped memory for tpu_custom_call.1']
    #allocation5 [shape = 's32[1]{0}', space=sflag, size = 0x4, scoped, tag = 'scoped memory for tpu_custom_call.1']
    #allocation6 [shape = 'u8[8192]{0}', space=vmem, size = 0x2000, scoped, tag = 'output window, operand 0, single buffered']
    %8 = vsyncpa [#allocation4], 0
    %9 = vsyncpa [#allocation5], 0
    // Predicated region
    $region2: #{tpu_custom_call.1} parent=1 // pred_check
      _
    $region3: #{tpu_custom_call.1} parent=1 // pred_check_branch
      %11 = sbr.rel (0) target = $region5
    $region4: #{tpu_custom_call.1} parent=1 // pred_region
      _
    $region5: #{tpu_custom_call.1} parent=1 // pred_fallthru
      _
    // Predicated region
    $region6: #{tpu_custom_call.1} parent=1 // pred_check
      _
    $region7: #{tpu_custom_call.1} parent=1 // pred_check_branch
      %13 = sbr.rel (0) target = $region9
    $region8: #{tpu_custom_call.1} parent=1 // pred_region
      %s15 = ssub.s32 256, 256
      %16 = vsyncadd [#allocation4], %s15
      %s18 = sshll.u32 [#allocation3], 4
      %s19 = int_to_ptr.vmem [resolvable:$true] %s18
      %21 = dma.hbm_to_vmem [thread:$0]  %s1, 256, %s19, [#allocation4]
    $region9: #{tpu_custom_call.1} parent=1 // pred_fallthru
      _
    // Predicated region
    $region10: #{tpu_custom_call.1} parent=1 // pred_check
      _
    $region11: #{tpu_custom_call.1} parent=1 // pred_check_branch
      %23 = sbr.rel (0) target = $region13
    $region12: #{tpu_custom_call.1} parent=1 // pred_region
      %24 = dma.done [#allocation4], 256
    $region13: #{tpu_custom_call.1} parent=1 // pred_fallthru
      _
    %s25 = sld [smem:[#allocation2]]
    %v26 = vld [vmem:[#allocation3] sm:$0xff]
    %v27 = vld [vmem:[#allocation3 + $0x8] sm:$0xff]
    %v28 = vstv %s25
    %v29 = vmul.f32 %v26, %v28
    %v30 = vmul.f32 %v27, %v28
    %31 = vst [vmem:[#allocation6] sm:$0xff] %v29
    %32 = vst [vmem:[#allocation6 + $0x8] sm:$0xff] %v30
    // Predicated region
    $region14: #{tpu_custom_call.1} parent=1 // pred_check
      _
    $region15: #{tpu_custom_call.1} parent=1 // pred_check_branch
      %34 = sbr.rel (0) target = $region17
    $region16: #{tpu_custom_call.1} parent=1 // pred_region
      %s36 = ssub.s32 256, 256
      %37 = vsyncadd [#allocation5], %s36
      %s39 = sshll.u32 [#allocation6], 4
      %s40 = int_to_ptr.vmem [resolvable:$true] %s39
      %42 = dma.vmem_to_hbm [thread:$0]  %s40, 256, %s2, [#allocation5]
    $region17: #{tpu_custom_call.1} parent=1 // pred_fallthru
      _
    // Predicated region
    $region18: #{tpu_custom_call.1} parent=1 // pred_check
      _
    $region19: #{tpu_custom_call.1} parent=1 // pred_check_branch
      %44 = sbr.rel (0) target = $region21
    $region20: #{tpu_custom_call.1} parent=1 // pred_region
      %45 = dma.done [#allocation5], 256
    $region21: #{tpu_custom_call.1} parent=1 // pred_fallthru
      _
    %46 = vsyncpa [#allocation4], 1
    %47 = vsyncpa [#allocation5], 1

</llo_original>
